<compile_context>
chip_gen: v6e
topology: v6e:2x2x1
jax: 0.10.0
libtpu: 0.0.40
codegen_flags: <defaults>
</compile_context>

<pallas_src>
import functools

import jax
import jax.numpy as jnp
from jax.experimental import pallas as pl
from jax.experimental.pallas import tpu as pltpu


def _round_up(x: int, m: int) -> int:
    return ((x + m - 1) // m) * m


def _fused_head_kernel(*refs, relu_flags):
    """Fused LinearHead body.

    refs layout: (x_ref, w0_ref, b0_ref, w1_ref, b1_ref, ..., o_ref).
    The per-layer Python loop is unrolled at trace time; intermediate
    activations stay in vregs -- only the final activation is stored.
    """
    x_ref = refs[0]
    o_ref = refs[-1]
    h = x_ref[...]
    for li, relu in enumerate(relu_flags):
        w = refs[1 + 2 * li][...]
        b = refs[2 + 2 * li][...]          # (1, f_out) f32: broadcasts over rows
        # Dtypes match per layer by construction (wrapper pre-casts); this is a
        # no-op on the f32 path and a safety net otherwise.
        lhs = h if h.dtype == w.dtype else h.astype(w.dtype)
        y = jnp.dot(lhs, w, preferred_element_type=jnp.float32) + b
        if relu:
            y = jnp.maximum(y, 0.0)        # elementwise stays f32 (v5e-safe)
        h = y
    o_ref[...] = h.astype(o_ref.dtype)


def linear_head_pallas(x, params, relu_flags, *, tile_n=1024, mxu_dtype=None,
                       single_shot_max_rows=256):
    """Run the whole LinearHead as one fused Pallas kernel.

    x:           (N, F_in) float32
    params:      list of (w_i, b_i) with w_i (F_in_i, F_out_i), b_i (F_out_i,)
    relu_flags:  list[bool], whether a ReLU follows linear i
    mxu_dtype:   optional narrow dtype (e.g. jnp.bfloat16) for the x stream and
                 the first layer's weights (pre-cast once, HBM-side).
    """
    n, f_in = x.shape
    f_out = params[-1][0].shape[1]
    out_dtype = x.dtype

    # --- Pre-cast HBM streams once in the wrapper (never per-step in-kernel).
    x_in = x
    casted_params = []
    if mxu_dtype is not None:
        x_in = x.astype(mxu_dtype)
        for li, (w, b) in enumerate(params):
            casted_params.append((w.astype(mxu_dtype) if li == 0 else w, b))
    else:
        casted_params = list(params)

    flat_inputs = [x_in]
    for w, b in casted_params:
        flat_inputs.append(w)
        flat_inputs.append(b.reshape(1, -1).astype(jnp.float32))  # 2-D f32 bias

    kernel = functools.partial(
        _fused_head_kernel, relu_flags=tuple(bool(r) for r in relu_flags))

    # --- VMEM budget: resident weights/biases + double-buffered act tiles.
    param_bytes = sum(int(w.size) * w.dtype.itemsize + int(b.size) * 4
                      for w, b in casted_params)
    try:
        vmem_phys = int(pltpu.get_tpu_info().vmem_capacity_bytes)
    except Exception:
        vmem_phys = 64 << 20                      # conservative (v7x)
    vmem_cap = int(vmem_phys * 0.85)

    def _vmem_limit(tile_rows, x_itemsize):
        need = (2 * tile_rows * f_in * x_itemsize   # double-buffered input tile
                + 2 * tile_rows * f_out * 4         # double-buffered output tile
                + param_bytes)                      # resident weights + biases
        return min(max(int(need * 1.5) + (2 << 20), 8 << 20), vmem_cap)

    # --- Single-shot path: whole arrays pinned in VMEM, no grid machinery.
    if n <= single_shot_max_rows:
        # TODO(synk): for very small n a plain-jnp fallback avoids the fixed
        # pallas_call launch cost; kept on the Pallas path so the kernel runs.
        vmem_space = pltpu.MemorySpace.VMEM
        return pl.pallas_call(
            kernel,
            out_shape=jax.ShapeDtypeStruct((n, f_out), out_dtype),
            in_specs=[pl.BlockSpec(memory_space=vmem_space)
                      for _ in flat_inputs],
            out_specs=pl.BlockSpec(memory_space=vmem_space),
            compiler_params=pltpu.CompilerParams(
                vmem_limit_bytes=_vmem_limit(max(n, 8), x_in.dtype.itemsize)),
        )(*flat_inputs)

    # --- Batch-tiled path: even grid >= 2 (both v7x TCs busy), tile a multiple
    #     of 8 sublanes, weights/biases VMEM-resident across grid steps.
    grid_steps = max(2, 2 * pl.cdiv(n, 2 * tile_n))
    tile = _round_up(pl.cdiv(n, grid_steps), 8)
    n_pad = grid_steps * tile
    if n_pad != n:
        # Zero-padded rows only pass through per-row bias+ReLU (no cross-row
        # mixing in this head) and are sliced off below.
        x_in = jnp.pad(x_in, ((0, n_pad - n), (0, 0)))
    flat_in = [x_in] + flat_inputs[1:]
    vmem_limit = _vmem_limit(tile, x_in.dtype.itemsize)

    def _build(single_buffer_weights):
        wmode = ({"pipeline_mode": pl.Buffered(1)}
                 if single_buffer_weights else {})
        in_specs = [pl.BlockSpec((tile, f_in), lambda i: (i, 0))]
        for w, _ in casted_params:
            fi, fo = w.shape
            in_specs.append(pl.BlockSpec((fi, fo), lambda i: (0, 0), **wmode))
            in_specs.append(pl.BlockSpec((1, fo), lambda i: (0, 0), **wmode))
        return pl.pallas_call(
            kernel,
            out_shape=jax.ShapeDtypeStruct((n_pad, f_out), out_dtype),
            grid=(grid_steps,),
            in_specs=in_specs,
            # f_out < 128 -> masked stores; padding lanes to 128 would inflate
            # output HBM bytes 16x, and the x stream dominates, so left as-is.
            out_specs=pl.BlockSpec((tile, f_out), lambda i: (i, 0)),
            compiler_params=pltpu.CompilerParams(
                dimension_semantics=("parallel",),
                vmem_limit_bytes=vmem_limit),
        )

    try:
        out = _build(True)(*flat_in)
    except Exception:
        # Some JAX versions reject single-buffered (Buffered(1)) blocks;
        # fall back to default double-buffering of the constant weight blocks.
        out = _build(False)(*flat_in)

    return out[:n] if n_pad != n else out


def _init_linear_params(key, f_in, f_out):
    """Deterministic init mimicking nn.Linear defaults (uniform +-1/sqrt(f_in))."""
    kw, kb = jax.random.split(key)
    bound = 1.0 / jnp.sqrt(jnp.float32(f_in))
    w = jax.random.uniform(kw, (f_in, f_out), jnp.float32, -bound, bound)
    b = jax.random.uniform(kb, (f_out,), jnp.float32, -bound, bound)
    return w, b


class LinearHead:
    """JAX/Pallas re-implementation of the PyTorch LinearHead module.

    Matches the PyTorch spec exactly:
      n_layers < 2 : Linear(in, out) -> ReLU          (ReLU IS applied)
      n_layers >= 2: Linear -> ReLU chain, final Linear has NO ReLU.
    """

    def __init__(self, in_features: int, out_features: int, n_layers: int = 0,
                 *, key=None):
        if key is None:
            key = jax.random.PRNGKey(42)
        self.params = []      # list of (w, b)
        self.relu_flags = []  # whether ReLU follows this linear

        if n_layers < 2:
            key, sub = jax.random.split(key)
            self.params.append(_init_linear_params(sub, in_features, out_features))
            self.relu_flags.append(True)
        else:
            _out = in_features // 2
            assert _out >= 1, "hidden width collapsed to 0"
            key, sub = jax.random.split(key)
            self.params.append(_init_linear_params(sub, in_features, _out))
            self.relu_flags.append(True)
            for i in range(1, n_layers - 1):
                _in = in_features // (i * 2)
                _out = in_features // ((i + 1) * 2)
                assert _out >= 1, "hidden width collapsed to 0"
                key, sub = jax.random.split(key)
                self.params.append(_init_linear_params(sub, _in, _out))
                self.relu_flags.append(True)
            key, sub = jax.random.split(key)
            self.params.append(_init_linear_params(sub, _out, out_features))
            self.relu_flags.append(False)

    def __call__(self, x, *, mxu_dtype=None, tile_n=1024):
        return linear_head_pallas(x, self.params, self.relu_flags,
                                  tile_n=tile_n, mxu_dtype=mxu_dtype)


def _reference(x, params, relu_flags):
    h = x
    for (w, b), relu in zip(params, relu_flags):
        h = h @ w + b
        if relu:
            h = jnp.maximum(h, 0.0)
    return h


if __name__ == "__main__":
    in_features = 32
    out_features = 8
    n_layers = 3  # -> Linear(32,16)+ReLU, Linear(16,8)+ReLU, Linear(8,8)

    head = LinearHead(in_features, out_features, n_layers,
                      key=jax.random.PRNGKey(0))

    k1, k2, k3 = jax.random.split(jax.random.PRNGKey(0), 3)

    # 1) Small batch -> single-shot fused kernel (whole arrays pinned in VMEM).
    x_small = jax.random.normal(k1, (8, in_features), jnp.float32)
    y_small = head(x_small)
    jax.block_until_ready(y_small)
    ref_small = _reference(x_small, head.params, head.relu_flags)
    assert y_small.shape == (8, out_features)
    assert jnp.allclose(y_small, ref_small, atol=1e-5, rtol=1e-5)

    # 2) Larger batch -> batch-tiled grid (even #steps for both v7x TCs),
    #    weights VMEM-resident, tile_n = 1024.
    x_big = jax.random.normal(k2, (2048, in_features), jnp.float32)
    y_big = head(x_big)
    jax.block_until_ready(y_big)
    ref_big = _reference(x_big, head.params, head.relu_flags)
    assert y_big.shape == (2048, out_features)
    assert jnp.allclose(y_big, ref_big, atol=1e-5, rtol=1e-5)

    # 2b) Non-multiple batch exercises row padding + slicing.
    x_odd = jax.random.normal(k3, (1000, in_features), jnp.float32)
    y_odd = head(x_odd)
    jax.block_until_ready(y_odd)
    ref_odd = _reference(x_odd, head.params, head.relu_flags)
    assert y_odd.shape == (1000, out_features)
    assert jnp.allclose(y_odd, ref_odd, atol=1e-5, rtol=1e-5)

    # 3) bf16 HBM streams (x + first-layer weights pre-cast in the wrapper);
    #    looser tolerance since one matmul runs with bf16 operands.
    y_bf16 = head(x_big, mxu_dtype=jnp.bfloat16)
    jax.block_until_ready(y_bf16)
    assert jnp.allclose(y_bf16, ref_big, atol=5e-2, rtol=5e-2)

    print("KERNEL_OK")
</pallas_src>

<mosaic_0001>
module attributes {stable_mosaic.version = 11 : i64} {
  func.func @_fused_head_kernel(%arg0: memref<8x32xf32, #tpu.memory_space<vmem>>, %arg1: memref<32x16xf32, #tpu.memory_space<vmem>>, %arg2: memref<1x16xf32, #tpu.memory_space<vmem>>, %arg3: memref<16x8xf32, #tpu.memory_space<vmem>>, %arg4: memref<1x8xf32, #tpu.memory_space<vmem>>, %arg5: memref<8x8xf32, #tpu.memory_space<vmem>>, %arg6: memref<1x8xf32, #tpu.memory_space<vmem>>, %arg7: memref<8x8xf32, #tpu.memory_space<vmem>>) attributes {dimension_semantics = [], scalar_prefetch = 0 : i64, scratch_operands = 0 : i64, tpu.core_type = #tpu.core_type<tc>} {
    %c0 = arith.constant 0 : index
    %c0_0 = arith.constant 0 : index
    %0 = vector.load %arg0[%c0, %c0_0] : memref<8x32xf32, #tpu.memory_space<vmem>>, vector<8x32xf32>
    %c0_1 = arith.constant 0 : index
    %c0_2 = arith.constant 0 : index
    %1 = vector.load %arg1[%c0_1, %c0_2] : memref<32x16xf32, #tpu.memory_space<vmem>>, vector<32x16xf32>
    %c0_3 = arith.constant 0 : index
    %c0_4 = arith.constant 0 : index
    %2 = vector.load %arg2[%c0_3, %c0_4] : memref<1x16xf32, #tpu.memory_space<vmem>>, vector<1x16xf32>
    %cst = arith.constant dense<0.000000e+00> : vector<8x16xf32>
    %3 = tpu.matmul %0, %1, %cst {dimension_numbers = #tpu.dot_dimension_numbers<[1], [0], [0], [1], [0, 0, 1, 1], [], []>} : vector<8x32xf32>, vector<32x16xf32>, vector<8x16xf32> -> vector<8x16xf32>
    %4 = vector.broadcast %2 : vector<1x16xf32> to vector<8x16xf32>
    %5 = arith.addf %3, %4 : vector<8x16xf32>
    %cst_5 = arith.constant 0.000000e+00 : f32
    %6 = vector.broadcast %cst_5 : f32 to vector<8x16xf32>
    %7 = arith.maximumf %5, %6 : vector<8x16xf32>
    %c0_6 = arith.constant 0 : index
    %c0_7 = arith.constant 0 : index
    %8 = vector.load %arg3[%c0_6, %c0_7] : memref<16x8xf32, #tpu.memory_space<vmem>>, vector<16x8xf32>
    %c0_8 = arith.constant 0 : index
    %c0_9 = arith.constant 0 : index
    %9 = vector.load %arg4[%c0_8, %c0_9] : memref<1x8xf32, #tpu.memory_space<vmem>>, vector<1x8xf32>
    %cst_10 = arith.constant dense<0.000000e+00> : vector<8x8xf32>
    %10 = tpu.matmul %7, %8, %cst_10 {dimension_numbers = #tpu.dot_dimension_numbers<[1], [0], [0], [1], [0, 0, 1, 1], [], []>} : vector<8x16xf32>, vector<16x8xf32>, vector<8x8xf32> -> vector<8x8xf32>
    %11 = vector.broadcast %9 : vector<1x8xf32> to vector<8x8xf32>
    %12 = arith.addf %10, %11 : vector<8x8xf32>
    %cst_11 = arith.constant 0.000000e+00 : f32
    %13 = vector.broadcast %cst_11 : f32 to vector<8x8xf32>
    %14 = arith.maximumf %12, %13 : vector<8x8xf32>
    %c0_12 = arith.constant 0 : index
    %c0_13 = arith.constant 0 : index
    %15 = vector.load %arg5[%c0_12, %c0_13] : memref<8x8xf32, #tpu.memory_space<vmem>>, vector<8x8xf32>
    %c0_14 = arith.constant 0 : index
    %c0_15 = arith.constant 0 : index
    %16 = vector.load %arg6[%c0_14, %c0_15] : memref<1x8xf32, #tpu.memory_space<vmem>>, vector<1x8xf32>
    %cst_16 = arith.constant dense<0.000000e+00> : vector<8x8xf32>
    %17 = tpu.matmul %14, %15, %cst_16 {dimension_numbers = #tpu.dot_dimension_numbers<[1], [0], [0], [1], [0, 0, 1, 1], [], []>} : vector<8x8xf32>, vector<8x8xf32>, vector<8x8xf32> -> vector<8x8xf32>
    %18 = vector.broadcast %16 : vector<1x8xf32> to vector<8x8xf32>
    %19 = arith.addf %17, %18 : vector<8x8xf32>
    %c0_17 = arith.constant 0 : index
    %c0_18 = arith.constant 0 : index
    %20 = vector.load %arg7[%c0_17, %c0_18] : memref<8x8xf32, #tpu.memory_space<vmem>>, vector<8x8xf32>
    tpu.vector_store %arg7[%c0_17, %c0_18], %19 {strides = array<i32>} : memref<8x8xf32, #tpu.memory_space<vmem>>, vector<8x8xf32>,
    return
  }
}

</mosaic_0001>

<llo_original>
// kernel: tpu_custom_call.1
$region0: #{tpu_custom_call.1}
  #allocation0 [shape = 'u32[]', space=smem, size = 0x4, offset = 0x4, fixed_abs, tag = 'smem constant byte address 0x4 - core index']
  #allocation1 [shape = 'u32[144,128]{1,0:T(1,128)}', space=vmem, size = 0x12000, scoped, tag = 'internal scratch']
  %s0 = inlined_call_operand.vmem [shape: f32[8,32], index: 0, kind: input, shape index: {}]
  %s1 = inlined_call_operand.vmem [shape: f32[32,16], index: 1, kind: input, shape index: {}]
  %s2 = inlined_call_operand.vmem [shape: f32[1,16], index: 2, kind: input, shape index: {}]
  %s3 = inlined_call_operand.vmem [shape: f32[16,8], index: 3, kind: input, shape index: {}]
  %s4 = inlined_call_operand.vmem [shape: f32[1,8], index: 4, kind: input, shape index: {}]
  %s5 = inlined_call_operand.vmem [shape: f32[8,8], index: 5, kind: input, shape index: {}]
  %s6 = inlined_call_operand.vmem [shape: f32[1,8], index: 6, kind: input, shape index: {}]
  %s7 = inlined_call_operand.hbm [shape: f32[8,8], index: 7, kind: output, shape index: {}]
  %s8 = sld [smem:[#allocation0]]
  $region38: #{tpu_custom_call.1} parent=0
    _
  %s10 = ssub.s32 1, %s8
  %s11 = scalar_select 0, %s10, %s8
  $region1: #{tpu_custom_call.1} parent=0
    #allocation2 [shape = 'u8[4096]{0}', space=vmem, size = 0x1000, scoped, tag = 'output window, operand 0, single buffered']
    #allocation3 [shape = 's32[1]{0}', space=sflag, size = 0x4, scoped, tag = 'scoped memory for tpu_custom_call.1']
    %12 = vsyncpa [#allocation3], 0
    // Predicated region
    $region2: #{tpu_custom_call.1} parent=1 // pred_check
      _
    $region3: #{tpu_custom_call.1} parent=1 // pred_check_branch
      %14 = sbr.rel (0) target = $region5
    $region4: #{tpu_custom_call.1} parent=1 // pred_region
      _
    $region5: #{tpu_custom_call.1} parent=1 // pred_fallthru
      _
    // Predicated region
    $region6: #{tpu_custom_call.1} parent=1 // pred_check
      _
    $region7: #{tpu_custom_call.1} parent=1 // pred_check_branch
      %16 = sbr.rel (0) target = $region9
    $region8: #{tpu_custom_call.1} parent=1 // pred_region
      _
    $region9: #{tpu_custom_call.1} parent=1 // pred_fallthru
      _
    // Predicated region
    $region10: #{tpu_custom_call.1} parent=1 // pred_check
      _
    $region11: #{tpu_custom_call.1} parent=1 // pred_check_branch
      %18 = sbr.rel (0) target = $region13
    $region12: #{tpu_custom_call.1} parent=1 // pred_region
      _
    $region13: #{tpu_custom_call.1} parent=1 // pred_fallthru
      _
    // Predicated region
    $region14: #{tpu_custom_call.1} parent=1 // pred_check
      _
    $region15: #{tpu_custom_call.1} parent=1 // pred_check_branch
      %20 = sbr.rel (0) target = $region17
    $region16: #{tpu_custom_call.1} parent=1 // pred_region
      _
    $region17: #{tpu_custom_call.1} parent=1 // pred_fallthru
      _
    // Predicated region
    $region18: #{tpu_custom_call.1} parent=1 // pred_check
      _
    $region19: #{tpu_custom_call.1} parent=1 // pred_check_branch
      %22 = sbr.rel (0) target = $region21
    $region20: #{tpu_custom_call.1} parent=1 // pred_region
      _
    $region21: #{tpu_custom_call.1} parent=1 // pred_fallthru
      _
    // Predicated region
    $region22: #{tpu_custom_call.1} parent=1 // pred_check
      _
    $region23: #{tpu_custom_call.1} parent=1 // pred_check_branch
      %24 = sbr.rel (0) target = $region25
    $region24: #{tpu_custom_call.1} parent=1 // pred_region
      _
    $region25: #{tpu_custom_call.1} parent=1 // pred_fallthru
      _
    // Predicated region
    $region26: #{tpu_custom_call.1} parent=1 // pred_check
      _
    $region27: #{tpu_custom_call.1} parent=1 // pred_check_branch
      %26 = sbr.rel (0) target = $region29
    $region28: #{tpu_custom_call.1} parent=1 // pred_region
      _
    $region29: #{tpu_custom_call.1} parent=1 // pred_fallthru
      _
    %v27 = vld [vmem:[%s0] sm:$0xff]
    %v28 = vld [vmem:[%s1] sm:$0xff]
    %v29 = vld [vmem:[%s1 + $0x8] sm:$0xff]
    %v30 = vld [vmem:[%s1 + $0x10] sm:$0xff]
    %v31 = vld [vmem:[%s1 + $0x18] sm:$0xff]
    %v32 = vld [vmem:[%s2] sm:$0x1]
    %v34 = vlaneseq
    %v35 = vshrl.u32 %v34, 7
    %v36 = vsub.s32 0, %v35
    %v37 = vrot.slane %v32, %v36
    %vm39 = vcmask 261120
    %v41 = vsel %vm39, %v27, 0
    %43 = vmatprep.subr.mxu0 0.0
    %44 = vmatpush1.msra.mxu0 0.0
    %45 = vmatprep.subr.mxu0 0.0
    %46 = vmatpush1.msra.mxu0 0.0
    %47 = vmatprep.subr.mxu0 0.0
    %48 = vmatpush1.msra.mxu0 0.0
    %49 = vmatprep.subr.mxu0 0.0
    %50 = vmatpush1.msra.mxu0 0.0
    %51 = vmatprep.subr.mxu0 0.0
    %52 = vmatpush1.msra.mxu0 0.0
    %53 = vmatprep.subr.mxu0 0.0
    %54 = vmatpush1.msra.mxu0 0.0
    %55 = vmatprep.subr.mxu0 0.0
    %56 = vmatpush1.msra.mxu0 0.0
    %57 = vmatprep.subr.mxu0 0.0
    %58 = vmatpush1.msra.mxu0 0.0
    %59 = vmatprep.subr.mxu0 0.0
    %60 = vmatpush1.msra.mxu0 0.0
    %61 = vmatprep.subr.mxu0 0.0
    %62 = vmatpush1.msra.mxu0 0.0
    %63 = vmatprep.subr.mxu0 0.0
    %64 = vmatpush1.msra.mxu0 0.0
    %65 = vmatprep.subr.mxu0 0.0
    %66 = vmatpush1.msra.mxu0 0.0
    %67 = vmatprep.subr.mxu0 0.0
    %68 = vmatpush1.msra.mxu0 %v31
    %69 = vmatprep.subr.mxu0 0.0
    %70 = vmatpush1.msra.mxu0 %v30
    %71 = vmatprep.subr.mxu0 0.0
    %72 = vmatpush1.msra.mxu0 %v29
    %73 = vmatprep.subr.mxu0 0.0
    %74 = vmatpush1.msra.mxu0 %v28
    %75 = vmatprep.subr.mxu0 0.0
    %76 = vmatpush2.msra.mxu0 0.0
    %77 = vmatprep.subr.mxu0 0.0
    %78 = vmatpush2.msra.mxu0 0.0
    %79 = vmatprep.subr.mxu0 0.0
    %80 = vmatpush2.msra.mxu0 0.0
    %81 = vmatprep.subr.mxu0 0.0
    %82 = vmatpush2.msra.mxu0 0.0
    %83 = vmatprep.subr.mxu0 0.0
    %84 = vmatpush2.msra.mxu0 0.0
    %85 = vmatprep.subr.mxu0 0.0
    %86 = vmatpush2.msra.mxu0 0.0
    %87 = vmatprep.subr.mxu0 0.0
    %88 = vmatpush2.msra.mxu0 0.0
    %89 = vmatprep.subr.mxu0 0.0
    %90 = vmatpush2.msra.mxu0 0.0
    %91 = vmatprep.subr.mxu0 0.0
    %92 = vmatpush2.msra.mxu0 0.0
    %93 = vmatprep.subr.mxu0 0.0
    %94 = vmatpush2.msra.mxu0 0.0
    %95 = vmatprep.subr.mxu0 0.0
    %96 = vmatpush2.msra.mxu0 0.0
    %97 = vmatprep.subr.mxu0 0.0
    %98 = vmatpush2.msra.mxu0 0.0
    %99 = vmatprep.subr.mxu0 0.0
    %100 = vmatpush2.msra.mxu0 0.0
    %101 = vmatprep.subr.mxu0 0.0
    %102 = vmatpush2.msra.mxu0 0.0
    %103 = vmatprep.subr.mxu0 0.0
    %104 = vmatpush2.msra.mxu0 0.0
    %105 = vmatprep.subr.mxu0 0.0
    %106 = vmatpush2.msra.mxu0 0.0
    %107 = vmatprep.mubr.f32.mxu0 0.0
    %108 = vmatmul.mubr.f32.gmra.mxu0 %v41
    %v109 = vpop.f32.mrf.mxu0
    %v110 = vadd.f32 %v37, %v109
    %v111 = vpop.f32.mrf.mxu0
    %112 = vdwg.mxu0
    %v113 = vmax.f32 %v110, 0.0
    %v114 = vld [vmem:[%s3] sm:$0xff]
    %v115 = vld [vmem:[%s3 + $0x8] sm:$0xff]
    %v116 = vld [vmem:[%s4] sm:$0x1]
    %v118 = vlaneseq
    %v119 = vshrl.u32 %v118, 7
    %v120 = vsub.s32 0, %v119
    %v121 = vrot.slane %v116, %v120
    %vm123 = vcmask 130048
    %v125 = vsel %vm123, %v113, 0
    %127 = vmatprep.subr.mxu0 0.0
    %128 = vmatpush1.msra.mxu0 0.0
    %129 = vmatprep.subr.mxu0 0.0
    %130 = vmatpush1.msra.mxu0 0.0
    %131 = vmatprep.subr.mxu0 0.0
    %132 = vmatpush1.msra.mxu0 0.0
    %133 = vmatprep.subr.mxu0 0.0
    %134 = vmatpush1.msra.mxu0 0.0
    %135 = vmatprep.subr.mxu0 0.0
    %136 = vmatpush1.msra.mxu0 0.0
    %137 = vmatprep.subr.mxu0 0.0
    %138 = vmatpush1.msra.mxu0 0.0
    %139 = vmatprep.subr.mxu0 0.0
    %140 = vmatpush1.msra.mxu0 0.0
    %141 = vmatprep.subr.mxu0 0.0
    %142 = vmatpush1.msra.mxu0 0.0
    %143 = vmatprep.subr.mxu0 0.0
    %144 = vmatpush1.msra.mxu0 0.0
    %145 = vmatprep.subr.mxu0 0.0
    %146 = vmatpush1.msra.mxu0 0.0
    %147 = vmatprep.subr.mxu0 0.0
    %148 = vmatpush1.msra.mxu0 0.0
    %149 = vmatprep.subr.mxu0 0.0
    %150 = vmatpush1.msra.mxu0 0.0
    %151 = vmatprep.subr.mxu0 0.0
    %152 = vmatpush1.msra.mxu0 0.0
    %153 = vmatprep.subr.mxu0 0.0
    %154 = vmatpush1.msra.mxu0 0.0
    %155 = vmatprep.subr.mxu0 0.0
    %156 = vmatpush1.msra.mxu0 %v115
    %157 = vmatprep.subr.mxu0 0.0
    %158 = vmatpush1.msra.mxu0 %v114
    %159 = vmatprep.subr.mxu0 0.0
    %160 = vmatpush2.msra.mxu0 0.0
    %161 = vmatprep.subr.mxu0 0.0
    %162 = vmatpush2.msra.mxu0 0.0
    %163 = vmatprep.subr.mxu0 0.0
    %164 = vmatpush2.msra.mxu0 0.0
    %165 = vmatprep.subr.mxu0 0.0
    %166 = vmatpush2.msra.mxu0 0.0
    %167 = vmatprep.subr.mxu0 0.0
    %168 = vmatpush2.msra.mxu0 0.0
    %169 = vmatprep.subr.mxu0 0.0
    %170 = vmatpush2.msra.mxu0 0.0
    %171 = vmatprep.subr.mxu0 0.0
    %172 = vmatpush2.msra.mxu0 0.0
    %173 = vmatprep.subr.mxu0 0.0
    %174 = vmatpush2.msra.mxu0 0.0
    %175 = vmatprep.subr.mxu0 0.0
    %176 = vmatpush2.msra.mxu0 0.0
    %177 = vmatprep.subr.mxu0 0.0
    %178 = vmatpush2.msra.mxu0 0.0
    %179 = vmatprep.subr.mxu0 0.0
    %180 = vmatpush2.msra.mxu0 0.0
    %181 = vmatprep.subr.mxu0 0.0
    %182 = vmatpush2.msra.mxu0 0.0
    %183 = vmatprep.subr.mxu0 0.0
    %184 = vmatpush2.msra.mxu0 0.0
    %185 = vmatprep.subr.mxu0 0.0
    %186 = vmatpush2.msra.mxu0 0.0
    %187 = vmatprep.subr.mxu0 0.0
    %188 = vmatpush2.msra.mxu0 0.0
    %189 = vmatprep.subr.mxu0 0.0
    %190 = vmatpush2.msra.mxu0 0.0
    %191 = vmatprep.mubr.f32.mxu0 0.0
    %192 = vmatmul.mubr.f32.gmra.mxu0 %v125
    %v193 = vpop.f32.mrf.mxu0
    %v194 = vadd.f32 %v121, %v193
    %v195 = vpop.f32.mrf.mxu0
    %196 = vdwg.mxu0
    %v197 = vmax.f32 %v194, 0.0
    %v198 = vld [vmem:[%s5] sm:$0xff]
    %v199 = vld [vmem:[%s6] sm:$0x1]
    %v201 = vlaneseq
    %v202 = vshrl.u32 %v201, 7
    %v203 = vsub.s32 0, %v202
    %v204 = vrot.slane %v199, %v203
    %vm206 = vcmask 64512
    %v208 = vsel %vm206, %v197, 0
    %210 = vmatprep.subr.mxu0 0.0
    %211 = vmatpush1.msra.mxu0 0.0
    %212 = vmatprep.subr.mxu0 0.0
    %213 = vmatpush1.msra.mxu0 0.0
    %214 = vmatprep.subr.mxu0 0.0
    %215 = vmatpush1.msra.mxu0 0.0
    %216 = vmatprep.subr.mxu0 0.0
    %217 = vmatpush1.msra.mxu0 0.0
    %218 = vmatprep.subr.mxu0 0.0
    %219 = vmatpush1.msra.mxu0 0.0
    %220 = vmatprep.subr.mxu0 0.0
    %221 = vmatpush1.msra.mxu0 0.0
    %222 = vmatprep.subr.mxu0 0.0
    %223 = vmatpush1.msra.mxu0 0.0
    %224 = vmatprep.subr.mxu0 0.0
    %225 = vmatpush1.msra.mxu0 0.0
    %226 = vmatprep.subr.mxu0 0.0
    %227 = vmatpush1.msra.mxu0 0.0
    %228 = vmatprep.subr.mxu0 0.0
    %229 = vmatpush1.msra.mxu0 0.0
    %230 = vmatprep.subr.mxu0 0.0
    %231 = vmatpush1.msra.mxu0 0.0
    %232 = vmatprep.subr.mxu0 0.0
    %233 = vmatpush1.msra.mxu0 0.0
    %234 = vmatprep.subr.mxu0 0.0
    %235 = vmatpush1.msra.mxu0 0.0
    %236 = vmatprep.subr.mxu0 0.0
    %237 = vmatpush1.msra.mxu0 0.0
    %238 = vmatprep.subr.mxu0 0.0
    %239 = vmatpush1.msra.mxu0 0.0
    %240 = vmatprep.subr.mxu0 0.0
    %241 = vmatpush1.msra.mxu0 %v198
    %242 = vmatprep.subr.mxu0 0.0
    %243 = vmatpush2.msra.mxu0 0.0
    %244 = vmatprep.subr.mxu0 0.0
    %245 = vmatpush2.msra.mxu0 0.0
    %246 = vmatprep.subr.mxu0 0.0
    %247 = vmatpush2.msra.mxu0 0.0
    %248 = vmatprep.subr.mxu0 0.0
    %249 = vmatpush2.msra.mxu0 0.0
    %250 = vmatprep.subr.mxu0 0.0
    %251 = vmatpush2.msra.mxu0 0.0
    %252 = vmatprep.subr.mxu0 0.0
    %253 = vmatpush2.msra.mxu0 0.0
    %254 = vmatprep.subr.mxu0 0.0
    %255 = vmatpush2.msra.mxu0 0.0
    %256 = vmatprep.subr.mxu0 0.0
    %257 = vmatpush2.msra.mxu0 0.0
    %258 = vmatprep.subr.mxu0 0.0
    %259 = vmatpush2.msra.mxu0 0.0
    %260 = vmatprep.subr.mxu0 0.0
    %261 = vmatpush2.msra.mxu0 0.0
    %262 = vmatprep.subr.mxu0 0.0
    %263 = vmatpush2.msra.mxu0 0.0
    %264 = vmatprep.subr.mxu0 0.0
    %265 = vmatpush2.msra.mxu0 0.0
    %266 = vmatprep.subr.mxu0 0.0
    %267 = vmatpush2.msra.mxu0 0.0
    %268 = vmatprep.subr.mxu0 0.0
    %269 = vmatpush2.msra.mxu0 0.0
    %270 = vmatprep.subr.mxu0 0.0
    %271 = vmatpush2.msra.mxu0 0.0
    %272 = vmatprep.subr.mxu0 0.0
    %273 = vmatpush2.msra.mxu0 0.0
    %274 = vmatprep.mubr.f32.mxu0 0.0
    %275 = vmatmul.mubr.f32.gmra.mxu0 %v208
    %v276 = vpop.f32.mrf.mxu0
    %v277 = vadd.f32 %v204, %v276
    %v278 = vpop.f32.mrf.mxu0
    %279 = vdwg.mxu0
    %280 = vst.msk [vmem:[#allocation2] sm:$0xff] %vm206, %v277
    // Predicated region
    $region30: #{tpu_custom_call.1} parent=1 // pred_check
      _
    $region31: #{tpu_custom_call.1} parent=1 // pred_check_branch
      %282 = sbr.rel (0) target = $region33
    $region32: #{tpu_custom_call.1} parent=1 // pred_region
      %s284 = ssub.s32 128, 128
      %285 = vsyncadd [#allocation3], %s284
      %s287 = sshll.u32 [#allocation2], 4
      %s288 = int_to_ptr.vmem [resolvable:$true] %s287
      %290 = dma.vmem_to_hbm [thread:$0]  %s288, 128, %s7, [#allocation3]
    $region33: #{tpu_custom_call.1} parent=1 // pred_fallthru
      _
    // Predicated region
    $region34: #{tpu_custom_call.1} parent=1 // pred_check
      _
    $region35: #{tpu_custom_call.1} parent=1 // pred_check_branch
      %292 = sbr.rel (0) target = $region37
    $region36: #{tpu_custom_call.1} parent=1 // pred_region
      %293 = dma.done [#allocation3], 128
    $region37: #{tpu_custom_call.1} parent=1 // pred_fallthru
      _
    %294 = vsyncpa [#allocation3], 1

</llo_original>
